<compile_context>
chip_gen: v7x
topology: tpu7x:2x2x1
jax: 0.10.0
libtpu: 0.0.40
codegen_flags: <defaults>
</compile_context>

<pallas_src>
import functools

import numpy as np
import jax
import jax.numpy as jnp
from jax.experimental import pallas as pl
from jax.experimental.pallas import tpu as pltpu

FACTORS = [1, 1, 1, 1, 1 / 2, 1 / 4, 1 / 8, 1 / 16, 1 / 32]
EPS = 1e-8
_VMEM_LIMIT = 32 * 2 ** 20          # explicit scoped-VMEM limit (raises v5e default, < v7x physical)
_TILE_BYTE_BUDGET = 12 * 2 ** 20    # per-row-tile working-set target so tiles fit every generation


# ----------------------------------------------------------------------------
# In-kernel helpers
# ----------------------------------------------------------------------------
def _leaky(y):
    # LeakyReLU(0.2) as a single maximum (cheaper than cmp+mul+select)
    return jnp.maximum(y, 0.2 * y)


def _pixelnorm(y):
    # x * rsqrt(mean(x^2) + eps): rsqrt goes to the EUP slot
    return y * jax.lax.rsqrt(jnp.mean(y * y, axis=-1, keepdims=True) + EPS)


def _nearest_up2(x):
    """(R, W, C) -> (2R, 2W, C) nearest-neighbour upsample using contiguity-preserving
    broadcasts/reshapes (minor dim unchanged)."""
    r, w, c = x.shape
    x = jnp.broadcast_to(x[:, :, None, :], (r, w, 2, c)).reshape(r, 2 * w, c)
    x = jnp.broadcast_to(x[:, None, :, :], (r, 2, 2 * w, c)).reshape(2 * r, 2 * w, c)
    return x


def _conv3x3_from_padded(xp, w9, b, rows, cols):
    """xp: (rows+2, cols+2, Cin) already zero-padded value; w9: (9*Cin, Cout) with the
    weight-scale folded in.  Single im2col matmul, then bias + LeakyReLU + PixelNorm.
    Returns flat (rows*cols, Cout)."""
    cin = xp.shape[-1]
    taps = [xp[kh:kh + rows, kw:kw + cols, :].reshape(rows * cols, cin)
            for kh in range(3) for kw in range(3)]
    patches = jnp.concatenate(taps, axis=-1)                        # (rows*cols, 9*Cin)
    y = jnp.dot(patches, w9, preferred_element_type=jnp.float32) + b
    return _pixelnorm(_leaky(y))


def _pick_tile_rows(h_out, bytes_per_row, max_rows=None):
    """Pick an output row-tile height that divides h_out and keeps the per-tile
    working set under the VMEM budget (h_out is always a power of two >= 8)."""
    th = h_out
    if max_rows is not None:
        while th > max_rows and th > 8:
            th //= 2
    while th > 16 and th * bytes_per_row > _TILE_BYTE_BUDGET:
        th //= 2
    assert h_out % th == 0 and th % 2 == 0
    return th


# ----------------------------------------------------------------------------
# Kernel 1: PixelNorm(z) -> ConvTranspose2d(z_dim, C, 4, 1, 0) -> LeakyReLU
# ----------------------------------------------------------------------------
def _initial_kernel(z_ref, w_ref, b_ref, o_ref):
    z = _pixelnorm(z_ref[...])                                       # PixelNorm over z_dim
    y = jnp.dot(z, w_ref[...], preferred_element_type=jnp.float32) + b_ref[...]
    o_ref[...] = _leaky(y)


def pallas_initial_convt(z, ct_w, ct_b):
    """z: (N, Z); ct_w: (Z, C, 4, 4) PyTorch ConvTranspose2d layout; ct_b: (C,).
    One batched matmul, lane-dense (N, 16*C) output, reshaped to (N, 4, 4, C)."""
    n, zdim = z.shape
    _, c, kh, kw = ct_w.shape
    f = kh * kw * c
    wt = jnp.transpose(ct_w, (0, 2, 3, 1)).reshape(zdim, f)          # (Z, h*w*c)
    bt = jnp.tile(ct_b, kh * kw).reshape(1, f)
    out = pl.pallas_call(
        _initial_kernel,
        out_shape=jax.ShapeDtypeStruct((n, f), jnp.float32),
    )(z, wt, bt)
    return out.reshape(n, kh, kw, c)


# ----------------------------------------------------------------------------
# Kernel 2: batched weight-scaled 3x3 conv on the 4x4 head (+ lrelu + pixelnorm)
# ----------------------------------------------------------------------------
def _head_conv_kernel(x_ref, w_ref, b_ref, o_ref, pad_ref, *, n, h, w, c):
    pad_ref[...] = jnp.zeros_like(pad_ref)
    pad_ref[:, 1:h + 1, 1:w + 1, :] = x_ref[...]
    xp = pad_ref[...]
    taps = [xp[:, kh:kh + h, kw:kw + w, :].reshape(n * h * w, c)
            for kh in range(3) for kw in range(3)]
    patches = jnp.concatenate(taps, axis=-1)                          # (N*h*w, 9*C)
    y = jnp.dot(patches, w_ref[...], preferred_element_type=jnp.float32) + b_ref[...]
    o_ref[...] = _pixelnorm(_leaky(y))


def pallas_head_conv3x3(x, w, b):
    n, h, wd, cin = x.shape
    cout = w.shape[0]
    scale = (2.0 / (cin * 9)) ** 0.5
    w9 = (jnp.transpose(w, (2, 3, 1, 0)) * scale).reshape(9 * cin, cout)   # scale folded
    bk = b.reshape(1, cout)
    out = pl.pallas_call(
        functools.partial(_head_conv_kernel, n=n, h=h, w=wd, c=cin),
        out_shape=jax.ShapeDtypeStruct((n * h * wd, cout), jnp.float32),
        scratch_shapes=[pltpu.VMEM((n, h + 2, wd + 2, cin), jnp.float32)],
    )(x, w9, bk)
    return out.reshape(n, h, wd, cout)


# ----------------------------------------------------------------------------
# Kernel 3: fused [2x upsample -> WSConv3x3 -> lrelu -> pn -> WSConv3x3 -> lrelu -> pn]
# ----------------------------------------------------------------------------
def _prog_block_kernel(x_ref, w1_ref, b1_ref, w2_ref, b2_ref, o_ref, up_pad, mid_pad,
                       *, th, win, cmid):
    wout = 2 * win
    t = pl.program_id(1)
    nt = pl.num_programs(1)
    lr0 = t * (th // 2)                     # first low-res row feeding this output tile

    # Zero-padded, 2x-upsampled input window for conv1 (1 upsampled-row-pair halo).
    up_pad[...] = jnp.zeros_like(up_pad)
    mid_pad[...] = jnp.zeros_like(mid_pad)
    up_pad[2:th + 2, 1:wout + 1, :] = _nearest_up2(x_ref[0, pl.ds(lr0, th // 2), :, :])

    @pl.when(t > 0)
    def _():
        up_pad[0:2, 1:wout + 1, :] = _nearest_up2(x_ref[0, pl.ds(lr0 - 1, 1), :, :])

    @pl.when(t < nt - 1)
    def _():
        up_pad[th + 2:th + 4, 1:wout + 1, :] = _nearest_up2(
            x_ref[0, pl.ds(lr0 + th // 2, 1), :, :])

    # conv1 over th+2 rows (extra row above/below becomes conv2's halo).
    mid = _conv3x3_from_padded(up_pad[...], w1_ref[...], b1_ref[...], th + 2, wout)
    mid_pad[:, 1:wout + 1, :] = mid.reshape(th + 2, wout, cmid)

    # Rows outside the image are conv2 zero-padding, not conv1 output.
    @pl.when(t == 0)
    def _():
        mid_pad[0:1, :, :] = jnp.zeros((1, wout + 2, cmid), jnp.float32)

    @pl.when(t == nt - 1)
    def _():
        mid_pad[th + 1:th + 2, :, :] = jnp.zeros((1, wout + 2, cmid), jnp.float32)

    # conv2 over th rows; store the flat (th*wout, Cout) matmul result directly.
    o_ref[0] = _conv3x3_from_padded(mid_pad[...], w2_ref[...], b2_ref[...], th, wout)


def pallas_prog_block(x, w1, b1, w2, b2, *, max_tile_rows=None):
    """x: (N, Hin, Win, Cin) low-res NHWC; w*: (Cout, Cin, 3, 3) PyTorch layout.
    Returns (N, 2*Hin, 2*Win, Cout)."""
    n, hin, win, cin = x.shape
    cmid = w1.shape[0]
    cout = w2.shape[0]
    hout, wout = 2 * hin, 2 * win
    s1 = (2.0 / (cin * 9)) ** 0.5
    s2 = (2.0 / (cmid * 9)) ** 0.5
    w1k = (jnp.transpose(w1, (2, 3, 1, 0)) * s1).reshape(9 * cin, cmid)    # scale folded
    w2k = (jnp.transpose(w2, (2, 3, 1, 0)) * s2).reshape(9 * cmid, cout)   # scale folded
    b1k = b1.reshape(1, cmid)
    b2k = b2.reshape(1, cout)

    bytes_per_row = 4 * wout * (cin + cmid + 9 * max(cin, cmid) + 2 * cout)
    th = _pick_tile_rows(hout, bytes_per_row, max_tile_rows)

    kernel = functools.partial(_prog_block_kernel, th=th, win=win, cmid=cmid)
    out = pl.pallas_call(
        kernel,
        out_shape=jax.ShapeDtypeStruct((n, hout * wout, cout), jnp.float32),
        grid=(n, hout // th),
        in_specs=[
            # whole low-res sample stays resident in VMEM across its row tiles
            pl.BlockSpec((1, hin, win, cin), lambda i, t: (i, 0, 0, 0)),
            pl.BlockSpec((9 * cin, cmid), lambda i, t: (0, 0)),
            pl.BlockSpec((1, cmid), lambda i, t: (0, 0)),
            pl.BlockSpec((9 * cmid, cout), lambda i, t: (0, 0)),
            pl.BlockSpec((1, cout), lambda i, t: (0, 0)),
        ],
        out_specs=pl.BlockSpec((1, th * wout, cout), lambda i, t: (i, t, 0)),
        scratch_shapes=[
            pltpu.VMEM((th + 4, wout + 2, cin), jnp.float32),   # padded upsampled tile
            pltpu.VMEM((th + 2, wout + 2, cmid), jnp.float32),  # padded conv1 output tile
        ],
        compiler_params=pltpu.CompilerParams(
            dimension_semantics=("parallel", "parallel"),
            vmem_limit_bytes=_VMEM_LIMIT),
    )(x, w1k, b1k, w2k, b2k)
    return out.reshape(n, hout, wout, cout)


# ----------------------------------------------------------------------------
# Kernel 4: fused to-RGB (both branches) + fade-in tanh, alpha from SMEM
# ----------------------------------------------------------------------------
def _rgb_fade_kernel(alpha_ref, lo_ref, hi_ref, wu_ref, bu_ref, wo_ref, bo_ref, o_ref,
                     *, th, wl, cu, co, cimg):
    wf = 2 * wl
    a = alpha_ref[0]
    # generated branch: 1x1 conv on the full-res tile
    hi = hi_ref[0].reshape(th * wf, co)
    gen = jnp.dot(hi, wo_ref[...], preferred_element_type=jnp.float32) + bo_ref[...]
    # upscaled branch: rgb(upsample(x)) == upsample(rgb(x)) -> compute at low res, upsample in VMEM
    lo = lo_ref[0].reshape((th // 2) * wl, cu)
    ups = jnp.dot(lo, wu_ref[...], preferred_element_type=jnp.float32) + bu_ref[...]
    ups = _nearest_up2(ups.reshape(th // 2, wl, cimg)).reshape(th * wf, cimg)
    o_ref[0] = jnp.tanh(a * gen + (1.0 - a) * ups)


def pallas_rgb_fade(alpha, prev_lowres, out_hires, wu, bu, wo, bo, *, max_tile_rows=None):
    n, hl, wl, cu = prev_lowres.shape
    _, hf, wf, co = out_hires.shape
    cimg = wo.shape[0]
    wu_k = jnp.transpose(wu[:, :, 0, 0], (1, 0)) * (2.0 / cu) ** 0.5
    wo_k = jnp.transpose(wo[:, :, 0, 0], (1, 0)) * (2.0 / co) ** 0.5
    bu_k = bu.reshape(1, cimg)
    bo_k = bo.reshape(1, cimg)
    alpha_arr = jnp.asarray(alpha, jnp.float32).reshape(1)

    bytes_per_row = 4 * wf * (co + cu + 4 * cimg)
    th = _pick_tile_rows(hf, bytes_per_row, max_tile_rows)

    kernel = functools.partial(_rgb_fade_kernel, th=th, wl=wl, cu=cu, co=co, cimg=cimg)
    out = pl.pallas_call(
        kernel,
        out_shape=jax.ShapeDtypeStruct((n, hf * wf, cimg), jnp.float32),
        grid=(n, hf // th),
        in_specs=[
            pl.BlockSpec(memory_space=pltpu.MemorySpace.SMEM),      # alpha scalar
            pl.BlockSpec((1, th // 2, wl, cu), lambda i, t: (i, t, 0, 0)),
            pl.BlockSpec((1, th, wf, co), lambda i, t: (i, t, 0, 0)),
            pl.BlockSpec((cu, cimg), lambda i, t: (0, 0)),
            pl.BlockSpec((1, cimg), lambda i, t: (0, 0)),
            pl.BlockSpec((co, cimg), lambda i, t: (0, 0)),
            pl.BlockSpec((1, cimg), lambda i, t: (0, 0)),
        ],
        out_specs=pl.BlockSpec((1, th * wf, cimg), lambda i, t: (i, t, 0)),
        compiler_params=pltpu.CompilerParams(
            dimension_semantics=("parallel", "parallel"),
            vmem_limit_bytes=_VMEM_LIMIT),
    )(alpha_arr, prev_lowres, out_hires, wu_k, bu_k, wo_k, bo_k)
    return out.reshape(n, hf, wf, cimg)


# ----------------------------------------------------------------------------
# Kernel 5: plain to-RGB (steps == 0 path)
# ----------------------------------------------------------------------------
def _to_rgb_kernel(x_ref, w_ref, b_ref, o_ref, *, p, c):
    x = x_ref[...].reshape(p, c)
    o_ref[...] = jnp.dot(x, w_ref[...], preferred_element_type=jnp.float32) + b_ref[...]


def pallas_to_rgb(x, w, b):
    n, h, wd, cin = x.shape
    cimg = w.shape[0]
    wk = jnp.transpose(w[:, :, 0, 0], (1, 0)) * (2.0 / cin) ** 0.5
    bk = b.reshape(1, cimg)
    out = pl.pallas_call(
        functools.partial(_to_rgb_kernel, p=n * h * wd, c=cin),
        out_shape=jax.ShapeDtypeStruct((n * h * wd, cimg), jnp.float32),
    )(x, wk, bk)
    return out.reshape(n, h, wd, cimg)


# ----------------------------------------------------------------------------
# Parameter init (deterministic, mirrors the PyTorch module's shapes)
# ----------------------------------------------------------------------------
def init_generator_params(key, z_dim, in_channels, img_channels, num_steps):
    keys = iter(jax.random.split(key, 4 + 4 * max(num_steps, 1)))
    p = {}
    p["ct_w"] = 0.2 * jax.random.normal(next(keys), (z_dim, in_channels, 4, 4), jnp.float32)
    p["ct_b"] = 0.1 * jax.random.normal(next(keys), (in_channels,), jnp.float32)
    p["init_w"] = jax.random.normal(next(keys), (in_channels, in_channels, 3, 3), jnp.float32)
    p["init_b"] = jnp.zeros((in_channels,), jnp.float32)
    rgb = [{"w": jax.random.normal(next(keys), (img_channels, in_channels, 1, 1), jnp.float32),
            "b": jnp.zeros((img_channels,), jnp.float32)}]
    blocks = []
    for i in range(num_steps):
        cin = int(in_channels * FACTORS[i])
        cout = int(in_channels * FACTORS[i + 1])
        blocks.append({
            "w1": jax.random.normal(next(keys), (cout, cin, 3, 3), jnp.float32),
            "b1": jnp.zeros((cout,), jnp.float32),
            "w2": jax.random.normal(next(keys), (cout, cout, 3, 3), jnp.float32),
            "b2": jnp.zeros((cout,), jnp.float32),
        })
        rgb.append({"w": jax.random.normal(next(keys), (img_channels, cout, 1, 1), jnp.float32),
                    "b": jnp.zeros((img_channels,), jnp.float32)})
    p["blocks"] = blocks
    p["rgb"] = rgb
    return p


# ----------------------------------------------------------------------------
# Generator forward (Pallas)
# ----------------------------------------------------------------------------
def generator_forward(params, z, alpha, steps, *, max_tile_rows=None):
    out = pallas_initial_convt(z, params["ct_w"], params["ct_b"])        # (N, 4, 4, C)
    out = pallas_head_conv3x3(out, params["init_w"], params["init_b"])   # (N, 4, 4, C)
    if steps == 0:
        r = params["rgb"][0]
        return pallas_to_rgb(out, r["w"], r["b"])
    prev = out
    for step in range(steps):
        blk = params["blocks"][step]
        prev = out
        out = pallas_prog_block(out, blk["w1"], blk["b1"], blk["w2"], blk["b2"],
                                max_tile_rows=max_tile_rows)
    ru = params["rgb"][steps - 1]
    rg = params["rgb"][steps]
    return pallas_rgb_fade(alpha, prev, out, ru["w"], ru["b"], rg["w"], rg["b"],
                           max_tile_rows=max_tile_rows)


# ----------------------------------------------------------------------------
# Pure-JAX reference (uses lax.conv) for verification
# ----------------------------------------------------------------------------
def ref_forward(params, z, alpha, steps):
    def pn(x):
        return x / jnp.sqrt(jnp.mean(x * x, axis=-1, keepdims=True) + EPS)

    def lrelu(x):
        return jnp.where(x > 0, x, 0.2 * x)

    def wsconv(x, w, b, k, padding):
        cin = w.shape[1]
        scale = (2.0 / (cin * k * k)) ** 0.5
        wk = jnp.transpose(w, (2, 3, 1, 0))  # HWIO
        y = jax.lax.conv_general_dilated(x * scale, wk, (1, 1), padding,
                                         dimension_numbers=("NHWC", "HWIO", "NHWC"))
        return y + b

    zn = z / jnp.sqrt(jnp.mean(z * z, axis=-1, keepdims=True) + EPS)
    y = jnp.einsum("nz,zchw->nhwc", zn, params["ct_w"]) + params["ct_b"]
    y = lrelu(y)
    out = pn(lrelu(wsconv(y, params["init_w"], params["init_b"], 3, "SAME")))
    if steps == 0:
        r = params["rgb"][0]
        return wsconv(out, r["w"], r["b"], 1, "VALID")
    for step in range(steps):
        upscaled = jnp.repeat(jnp.repeat(out, 2, axis=1), 2, axis=2)
        blk = params["blocks"][step]
        out = pn(lrelu(wsconv(upscaled, blk["w1"], blk["b1"], 3, "SAME")))
        out = pn(lrelu(wsconv(out, blk["w2"], blk["b2"], 3, "SAME")))
    ru = params["rgb"][steps - 1]
    rg = params["rgb"][steps]
    fu = wsconv(upscaled, ru["w"], ru["b"], 1, "VALID")
    fo = wsconv(out, rg["w"], rg["b"], 1, "VALID")
    return jnp.tanh(alpha * fo + (1.0 - alpha) * fu)


# ----------------------------------------------------------------------------
if __name__ == "__main__":
    Z_DIM, IN_CH, IMG_CH = 32, 16, 1
    N, STEPS, ALPHA = 2, 2, 0.6          # output resolution 4 * 2**STEPS = 16

    key = jax.random.PRNGKey(0)
    kp, kz = jax.random.split(key)
    params = init_generator_params(kp, Z_DIM, IN_CH, IMG_CH, STEPS)
    # PyTorch input is (N, z_dim, 1, 1); we pass the squeezed latent (N, z_dim).
    z = jax.random.normal(kz, (N, Z_DIM), jnp.float32)

    out = generator_forward(params, z, ALPHA, STEPS)
    out = jax.block_until_ready(out)
    assert out.shape == (N, 4 * 2 ** STEPS, 4 * 2 ** STEPS, IMG_CH)

    ref = ref_forward(params, z, ALPHA, STEPS)
    np.testing.assert_allclose(np.asarray(out), np.asarray(ref), rtol=1e-3, atol=1e-3)

    # Also exercise the multi-row-tile (halo) path of the fused block / fade kernels.
    out_tiled = generator_forward(params, z, ALPHA, STEPS, max_tile_rows=8)
    out_tiled = jax.block_until_ready(out_tiled)
    np.testing.assert_allclose(np.asarray(out_tiled), np.asarray(ref), rtol=1e-3, atol=1e-3)

    print("KERNEL_OK")
</pallas_src>

<mosaic_0001>
module attributes {stable_mosaic.version = 11 : i64} {
  func.func @_initial_kernel(%arg0: memref<2x32xf32, #tpu.memory_space<vmem>>, %arg1: memref<32x256xf32, #tpu.memory_space<vmem>>, %arg2: memref<1x256xf32, #tpu.memory_space<vmem>>, %arg3: memref<2x256xf32, #tpu.memory_space<vmem>>) attributes {dimension_semantics = [], scalar_prefetch = 0 : i64, scratch_operands = 0 : i64, tpu.core_type = #tpu.core_type<tc>} {
    %c0 = arith.constant 0 : index
    %c0_0 = arith.constant 0 : index
    %0 = vector.load %arg0[%c0, %c0_0] : memref<2x32xf32, #tpu.memory_space<vmem>>, vector<2x32xf32>
    %1 = arith.mulf %0, %0 : vector<2x32xf32>
    %cst = arith.constant dense<0.000000e+00> : vector<2xf32>
    %2 = vector.multi_reduction <add>, %1, %cst [1] : vector<2x32xf32> to vector<2xf32>
    %3 = vector.shape_cast %2 : vector<2xf32> to vector<2x1xf32>
    %cst_1 = arith.constant 3.200000e+01 : f32
    %4 = vector.broadcast %cst_1 : f32 to vector<2x1xf32>
    %5 = arith.divf %3, %4 : vector<2x1xf32>
    %cst_2 = arith.constant 9.99999993E-9 : f32
    %6 = vector.broadcast %cst_2 : f32 to vector<2x1xf32>
    %7 = arith.addf %5, %6 : vector<2x1xf32>
    %8 = math.rsqrt %7 : vector<2x1xf32>
    %9 = vector.broadcast %8 : vector<2x1xf32> to vector<2x32xf32>
    %10 = arith.mulf %0, %9 : vector<2x32xf32>
    %c0_3 = arith.constant 0 : index
    %c0_4 = arith.constant 0 : index
    %11 = vector.load %arg1[%c0_3, %c0_4] : memref<32x256xf32, #tpu.memory_space<vmem>>, vector<32x256xf32>
    %cst_5 = arith.constant dense<0.000000e+00> : vector<2x256xf32>
    %12 = tpu.matmul %10, %11, %cst_5 {dimension_numbers = #tpu.dot_dimension_numbers<[1], [0], [0], [1], [0, 0, 1, 1], [], []>} : vector<2x32xf32>, vector<32x256xf32>, vector<2x256xf32> -> vector<2x256xf32>
    %c0_6 = arith.constant 0 : index
    %c0_7 = arith.constant 0 : index
    %13 = vector.load %arg2[%c0_6, %c0_7] : memref<1x256xf32, #tpu.memory_space<vmem>>, vector<1x256xf32>
    %14 = vector.broadcast %13 : vector<1x256xf32> to vector<2x256xf32>
    %15 = arith.addf %12, %14 : vector<2x256xf32>
    %cst_8 = arith.constant 2.000000e-01 : f32
    %16 = vector.broadcast %cst_8 : f32 to vector<2x256xf32>
    %17 = arith.mulf %16, %15 : vector<2x256xf32>
    %18 = arith.maximumf %15, %17 : vector<2x256xf32>
    %c0_9 = arith.constant 0 : index
    %c0_10 = arith.constant 0 : index
    %19 = vector.load %arg3[%c0_9, %c0_10] : memref<2x256xf32, #tpu.memory_space<vmem>>, vector<2x256xf32>
    tpu.vector_store %arg3[%c0_9, %c0_10], %18 {strides = array<i32>} : memref<2x256xf32, #tpu.memory_space<vmem>>, vector<2x256xf32>,
    return
  }
}

</mosaic_0001>

<llo_original>
// kernel: tpu_custom_call.1
$region0: #{tpu_custom_call.1}
  #allocation0 [shape = 'u32[]', space=smem, size = 0x4, offset = 0x4, fixed_abs, tag = 'smem constant byte address 0x4 - core index']
  #allocation1 [shape = 'u32[144,128]{1,0:T(1,128)}', space=vmem, size = 0x12000, scoped, tag = 'internal scratch']
  %s0 = inlined_call_operand.hbm [shape: f32[2,32], index: 0, kind: input, shape index: {}]
  %s1 = inlined_call_operand.hbm [shape: f32[32,256], index: 1, kind: input, shape index: {}]
  %s2 = inlined_call_operand.vmem [shape: f32[1,256], index: 2, kind: input, shape index: {}]
  %s3 = inlined_call_operand.hbm [shape: f32[2,256], index: 3, kind: output, shape index: {}]
  %s4 = sld [smem:[#allocation0]]
  $region30: #{tpu_custom_call.1} parent=0
    _
  %s6 = ssub.s32 1, %s4
  %s7 = scalar_select 0, %s6, %s4
  $region1: #{tpu_custom_call.1} parent=0
    #allocation2 [shape = 'u8[1024]{0}', space=vmem, size = 0x400, scoped, tag = 'input window, operand 0, single buffered']
    #allocation3 [shape = 's32[1]{0}', space=sflag, size = 0x4, scoped, tag = 'scoped memory for tpu_custom_call.1']
    #allocation4 [shape = 's32[1]{0}', space=sflag, size = 0x4, scoped, tag = 'scoped memory for tpu_custom_call.1']
    #allocation5 [shape = 'u8[32768]{0}', space=vmem, size = 0x8000, scoped, tag = 'input window, operand 1, single buffered']
    #allocation6 [shape = 's32[1]{0}', space=sflag, size = 0x4, scoped, tag = 'scoped memory for tpu_custom_call.1']
    #allocation7 [shape = 'u8[2048]{0}', space=vmem, size = 0x800, scoped, tag = 'output window, operand 0, single buffered']
    %8 = vsyncpa [#allocation3], 0
    %9 = vsyncpa [#allocation6], 0
    %10 = vsyncpa [#allocation4], 0
    // Predicated region
    $region2: #{tpu_custom_call.1} parent=1 // pred_check
      _
    $region3: #{tpu_custom_call.1} parent=1 // pred_check_branch
      %12 = sbr.rel (0) target = $region5
    $region4: #{tpu_custom_call.1} parent=1 // pred_region
      %s14 = ssub.s32 32, 32
      %15 = vsyncadd [#allocation3], %s14
      %s17 = sshll.u32 [#allocation2], 4
      %s18 = int_to_ptr.vmem [resolvable:$true] %s17
      %20 = dma.hbm_to_vmem [thread:$0]  %s0, 32, %s18, [#allocation3]
    $region5: #{tpu_custom_call.1} parent=1 // pred_fallthru
      _
    // Predicated region
    $region6: #{tpu_custom_call.1} parent=1 // pred_check
      _
    $region7: #{tpu_custom_call.1} parent=1 // pred_check_branch
      %22 = sbr.rel (0) target = $region9
    $region8: #{tpu_custom_call.1} parent=1 // pred_region
      %s24 = ssub.s32 1024, 1024
      %25 = vsyncadd [#allocation6], %s24
      %s26 = sshll.u32 [#allocation5], 4
      %s27 = int_to_ptr.vmem [resolvable:$true] %s26
      %32 = dma.hbm_to_vmem [thread:$0]  %s1, 1024, %s27, [#allocation6], 256, 256, 16
    $region9: #{tpu_custom_call.1} parent=1 // pred_fallthru
      _
    // Predicated region
    $region10: #{tpu_custom_call.1} parent=1 // pred_check
      _
    $region11: #{tpu_custom_call.1} parent=1 // pred_check_branch
      %34 = sbr.rel (0) target = $region13
    $region12: #{tpu_custom_call.1} parent=1 // pred_region
      _
    $region13: #{tpu_custom_call.1} parent=1 // pred_fallthru
      _
    // Predicated region
    $region14: #{tpu_custom_call.1} parent=1 // pred_check
      _
    $region15: #{tpu_custom_call.1} parent=1 // pred_check_branch
      %36 = sbr.rel (0) target = $region17
    $region16: #{tpu_custom_call.1} parent=1 // pred_region
      %37 = dma.done [#allocation3], 32
    $region17: #{tpu_custom_call.1} parent=1 // pred_fallthru
      _
    // Predicated region
    $region18: #{tpu_custom_call.1} parent=1 // pred_check
      _
    $region19: #{tpu_custom_call.1} parent=1 // pred_check_branch
      %39 = sbr.rel (0) target = $region21
    $region20: #{tpu_custom_call.1} parent=1 // pred_region
      %40 = dma.done [#allocation6], 1024
    $region21: #{tpu_custom_call.1} parent=1 // pred_fallthru
      _
    %v41 = vld [vmem:[#allocation2] sm:$0x3]
    %v42 = vmul.f32 %v41, %v41
    %vm43 = vcmask 254976
    %v44 = vsel %vm43, %v42, 0.0
    %45 = vadd.xlane.f32.xlu0 %v44
    %v46 = vpop.xlane.xlu0 %45
    %v47 = vrcp.pop 32.0
    %v48 = vmul.f32 %v46, %v47
    %v49 = vadd.f32 %v48, 1e-08
    %v50 = vrsqrt.pop %v49
    %v51 = vmul.f32 %v41, %v50
    %v52 = vld [vmem:[#allocation5] sm:$0xff]
    %v53 = vld [vmem:[#allocation5 + $0x8] sm:$0xff]
    %v54 = vld [vmem:[#allocation5 + $0x10] sm:$0xff]
    %v55 = vld [vmem:[#allocation5 + $0x18] sm:$0xff]
    %v56 = vld [vmem:[#allocation5 + $0x20] sm:$0xff]
    %v57 = vld [vmem:[#allocation5 + $0x28] sm:$0xff]
    %v58 = vld [vmem:[#allocation5 + $0x30] sm:$0xff]
    %v59 = vld [vmem:[#allocation5 + $0x38] sm:$0xff]
    %v60 = vld [vmem:[%s2] sm:$0x3]
    %v62 = vlaneseq
    %v63 = vshrl.u32 %v62, 7
    %v64 = vsub.s32 0, %v63
    %v65 = vrot.slane %v60, %v64
    %v66 = vlaneseq
    %v67 = vshrl.u32 %v66, 7
    %v68 = vsub.s32 1, %v67
    %v69 = vrot.slane %v60, %v68
    %vm72 = vcmask 261120
    %v74 = vsel %vm72, %v51, 0
    %76 = vmatprep.subr.mxu0 %v53
    %77 = vmatpush1.msra.mxu0 %v52
    %78 = vmatprep.subr.mxu0 %v55
    %79 = vmatpush1.msra.mxu0 %v54
    %80 = vmatprep.subr.mxu0 %v57
    %81 = vmatpush1.msra.mxu0 %v56
    %82 = vmatprep.subr.mxu0 %v59
    %83 = vmatpush1.msra.mxu0 %v58
    %84 = vmatprep.subr.mxu0 0.0
    %85 = vmatpush1.msra.mxu0 0.0
    %86 = vmatprep.subr.mxu0 0.0
    %87 = vmatpush1.msra.mxu0 0.0
    %88 = vmatprep.subr.mxu0 0.0
    %89 = vmatpush1.msra.mxu0 0.0
    %90 = vmatprep.subr.mxu0 0.0
    %91 = vmatpush1.msra.mxu0 0.0
    %92 = vmatprep.subr.mxu0 0.0
    %93 = vmatpush1.msra.mxu0 0.0
    %94 = vmatprep.subr.mxu0 0.0
    %95 = vmatpush1.msra.mxu0 0.0
    %96 = vmatprep.subr.mxu0 0.0
    %97 = vmatpush1.msra.mxu0 0.0
    %98 = vmatprep.subr.mxu0 0.0
    %99 = vmatpush1.msra.mxu0 0.0
    %100 = vmatprep.subr.mxu0 0.0
    %101 = vmatpush1.msra.mxu0 0.0
    %102 = vmatprep.subr.mxu0 0.0
    %103 = vmatpush1.msra.mxu0 0.0
    %104 = vmatprep.subr.mxu0 0.0
    %105 = vmatpush1.msra.mxu0 0.0
    %106 = vmatprep.subr.mxu0 0.0
    %107 = vmatpush1.msra.mxu0 0.0
    %108 = vmatprep.subr.mxu0 0.0
    %109 = vmatpush1.msra.mxu0 0.0
    %110 = vmatprep.subr.mxu0 0.0
    %111 = vmatpush1.msra.mxu0 0.0
    %112 = vmatprep.subr.mxu0 0.0
    %113 = vmatpush1.msra.mxu0 0.0
    %114 = vmatprep.subr.mxu0 0.0
    %115 = vmatpush1.msra.mxu0 0.0
    %116 = vmatprep.subr.mxu0 0.0
    %117 = vmatpush1.msra.mxu0 0.0
    %118 = vmatprep.subr.mxu0 0.0
    %119 = vmatpush1.msra.mxu0 0.0
    %120 = vmatprep.subr.mxu0 0.0
    %121 = vmatpush1.msra.mxu0 0.0
    %122 = vmatprep.subr.mxu0 0.0
    %123 = vmatpush1.msra.mxu0 0.0
    %124 = vmatprep.subr.mxu0 0.0
    %125 = vmatpush1.msra.mxu0 0.0
    %126 = vmatprep.subr.mxu0 0.0
    %127 = vmatpush1.msra.mxu0 0.0
    %128 = vmatprep.subr.mxu0 0.0
    %129 = vmatpush1.msra.mxu0 0.0
    %130 = vmatprep.subr.mxu0 0.0
    %131 = vmatpush1.msra.mxu0 0.0
    %132 = vmatprep.subr.mxu0 0.0
    %133 = vmatpush1.msra.mxu0 0.0
    %134 = vmatprep.subr.mxu0 0.0
    %135 = vmatpush1.msra.mxu0 0.0
    %136 = vmatprep.subr.mxu0 0.0
    %137 = vmatpush1.msra.mxu0 0.0
    %138 = vmatprep.subr.mxu0 0.0
    %139 = vmatpush1.msra.mxu0 0.0
    %140 = vmatprep.mubr.f32.mxu0 0.0
    %141 = vmatmul.mubr.f32.gmra.mrb[0].mxu0 %v74
    %v142 = vpop.f32.mrb[0].mxu0
    %v143 = vadd.f32 %v65, %v142
    %v144 = vpop.f32.mrb[0].mxu0
    %v145 = vadd.f32 %v69, %v144
    %146 = vdwg.mxu0
    %v147 = vmul.f32 %v143, 0.2
    %v148 = vmul.f32 %v145, 0.2
    %v149 = vmax.f32 %v143, %v147
    %v150 = vmax.f32 %v145, %v148
    %v153 = vcombine.low %v149, %v150
    %v155 = vunpack.c.l.s4 1983009808
    %v156 = vunpack.c.0.s8 %v155
    %v157 = vlaneseq
    %v158 = vshrl.u32 %v157, 7
    %v159 = vsub.s32 %v156, %v158
    %v160 = vrot.slane %v153, %v159
    %162 = vst [vmem:[#allocation7] sm:$0xf] %v160
    // Predicated region
    $region22: #{tpu_custom_call.1} parent=1 // pred_check
      _
    $region23: #{tpu_custom_call.1} parent=1 // pred_check_branch
      %164 = sbr.rel (0) target = $region25
    $region24: #{tpu_custom_call.1} parent=1 // pred_region
      %s166 = ssub.s32 64, 64
      %167 = vsyncadd [#allocation4], %s166
      %s169 = sshll.u32 [#allocation7], 4
      %s170 = int_to_ptr.vmem [resolvable:$true] %s169
      %172 = dma.vmem_to_hbm [thread:$0]  %s170, 64, %s3, [#allocation4]
    $region25: #{tpu_custom_call.1} parent=1 // pred_fallthru
      _
    // Predicated region
    $region26: #{tpu_custom_call.1} parent=1 // pred_check
      _
    $region27: #{tpu_custom_call.1} parent=1 // pred_check_branch
      %174 = sbr.rel (0) target = $region29
    $region28: #{tpu_custom_call.1} parent=1 // pred_region
      %175 = dma.done [#allocation4], 64
    $region29: #{tpu_custom_call.1} parent=1 // pred_fallthru
      _
    %176 = vsyncpa [#allocation3], 1
    %177 = vsyncpa [#allocation6], 1
    %178 = vsyncpa [#allocation4], 1

</llo_original>
